<compile_context>
chip_gen: v7x
topology: tpu7x:2x2x1
jax: 0.10.0
libtpu: 0.0.40
codegen_flags: <defaults>
</compile_context>

<pallas_src>
import jax
import jax.numpy as jnp
from jax.experimental import pallas as pl
from jax.experimental.pallas import tpu as pltpu

NUM_MODELS = 15


def _round_up(n, m):
    return ((n + m - 1) // m) * m


def _pad_axis(x, axis, target):
    pad = target - x.shape[axis]
    if pad == 0:
        return x
    widths = [(0, 0)] * x.ndim
    widths[axis] = (0, pad)
    return jnp.pad(x, widths)


def _make_fused_head_kernel(hfp):
    """Kernel over one batch tile.  All 15 heads fused into two MXU matmuls."""

    def kernel(pooled_ref, w1_ref, w2_ref, bias_ref, o_ref):
        # pooled_ref: [TB, C]        pooled features (compute dtype, C unpadded)
        # w1_ref:     [C, HFp]       15 models' W1 concatenated along hidden axis
        # w2_ref:     [HFp, NCp]     15 models' W2 row-stacked, pre-scaled by 1/15
        # bias_ref:   [1, HFp+NCp]   f32 [b1_fused || mean_m(b2_m)]
        # o_ref:      [TB, NCp]      f32 ensemble-mean logits
        b1 = bias_ref[:, :hfp]            # [1, HFp]   (static, 128-aligned slice)
        b2 = bias_ref[:, hfp:]            # [1, NCp]
        h = jnp.dot(pooled_ref[...], w1_ref[...],
                    preferred_element_type=jnp.float32)
        h = jnp.maximum(h + b1, 0.0)
        # Row-block structure of w2 gives exactly sum_m h_m @ (W2_m / 15).
        s = jnp.dot(h.astype(w2_ref.dtype), w2_ref[...],
                    preferred_element_type=jnp.float32)
        o_ref[...] = s + b2

    return kernel


def prepare_fusion_ensemble_params(w1, b1, w2, b2, *,
                                   compute_dtype=jnp.bfloat16):
    """One-time fusion / padding / casting of the 15 heads (hoisted out of
    the per-call path).  Returns a params dict consumed by
    fusion_ensemble_apply."""
    M, C, HID = w1.shape
    NC = w2.shape[-1]
    assert M == NUM_MODELS
    HF = M * HID
    HFp = _round_up(HF, 128)          # hidden lanes -> 128-aligned
    NCp = _round_up(NC, 128)          # class lanes  -> 128-aligned (lane-dense vst)

    # Fuse all heads into two matmuls and fold the 1/15 ensemble mean:
    #   W1f[c, m*HID + h] = W1[m, c, h]            -> [C, 15*HID]
    #   W2f[m*HID + h, :] = W2[m, h, :] / 15       -> [15*HID, NC]
    #   bias = [ b1_fused || mean_m b2_m ]         (added once in the epilogue)
    w1f = jnp.transpose(w1, (1, 0, 2)).reshape(C, HF)
    w2f = w2.reshape(HF, NC) * (1.0 / M)
    b1f = b1.reshape(1, HF)
    b2m = jnp.mean(b2, axis=0).reshape(1, NC)

    w1_p = _pad_axis(w1f, 1, HFp).astype(compute_dtype)                    # [C, HFp]
    w2_p = _pad_axis(_pad_axis(w2f, 0, HFp), 1, NCp).astype(compute_dtype)  # [HFp, NCp]
    bias_p = jnp.concatenate(
        [_pad_axis(b1f, 1, HFp), _pad_axis(b2m, 1, NCp)],
        axis=1).astype(jnp.float32)                                         # [1, HFp+NCp]

    sublane = 8 * (4 // jnp.dtype(compute_dtype).itemsize)   # 8 for f32, 16 for bf16

    return dict(w1=w1_p, w2=w2_p, bias=bias_p,
                C=C, NC=NC, HFp=HFp, NCp=NCp,
                compute_dtype=compute_dtype, sublane=sublane)


def fusion_ensemble_apply(x_nchw, params):
    """x_nchw: [B, C, H, W] float32.  Returns [B, num_classes] float32."""
    B = x_nchw.shape[0]
    C, NC = params["C"], params["NC"]
    HFp, NCp = params["HFp"], params["NCp"]
    cdt = params["compute_dtype"]
    sub = params["sublane"]
    assert x_nchw.shape[1] == C

    # Global average pool: one XLA memory-bound reduce; only the tiny [B, C]
    # pooled tensor enters the kernel (no feature map resident in VMEM).
    pooled = jnp.mean(x_nchw.astype(jnp.float32), axis=(2, 3))   # [B, C]

    # Batch tile selection:
    #   small B            -> single tile (grid=(1,))
    #   256 < B_r < 512    -> TB=128 so >= 2 tiles feed both v7x TensorCores
    #   B_r >= 512         -> TB=256 fills the 256-wide MXU on v6e/v7x
    B_r = _round_up(B, sub)
    if B_r <= 256:
        TB = B_r
    elif B_r < 512:
        TB = 128
    else:
        TB = 256
    Bp = _round_up(B, TB)

    pooled_p = _pad_axis(pooled, 0, Bp).astype(cdt)   # [Bp, C]; C left unpadded

    kernel = _make_fused_head_kernel(HFp)

    def _run(single_buffer_weights):
        if single_buffer_weights:
            # Grid-invariant weights: never re-fetched across batch tiles, so
            # single-buffer them (halves weight VMEM at real-backbone C).
            def res(shape):
                return pl.BlockSpec(shape, lambda i: (0, 0),
                                    pipeline_mode=pl.Buffered(1))
        else:
            def res(shape):
                return pl.BlockSpec(shape, lambda i: (0, 0))

        return pl.pallas_call(
            kernel,
            out_shape=jax.ShapeDtypeStruct((Bp, NCp), jnp.float32),
            grid=(Bp // TB,),
            in_specs=[
                pl.BlockSpec((TB, C), lambda i: (i, 0)),   # pooled (batch-tiled)
                res((C, HFp)),                              # fused W1 (resident)
                res((HFp, NCp)),                            # fused W2/15 (resident)
                res((1, HFp + NCp)),                        # fused biases (resident)
            ],
            out_specs=pl.BlockSpec((TB, NCp), lambda i: (i, 0)),
            compiler_params=pltpu.CompilerParams(
                dimension_semantics=("parallel",)),
        )(pooled_p, params["w1"], params["w2"], params["bias"])

    try:
        out = _run(True)
    except Exception:
        # Fallback for Pallas versions without pipeline_mode / Buffered(1)
        # support on top-level BlockSpecs (default double-buffering).
        out = _run(False)

    return out[:B, :NC]


def _reference(x_nchw, w1, b1, w2, b2):
    pooled = jnp.mean(x_nchw.astype(jnp.float32), axis=(2, 3))   # [B, C]
    outs = []
    for m in range(NUM_MODELS):
        h = jnp.maximum(pooled @ w1[m] + b1[m], 0.0)
        outs.append(h @ w2[m] + b2[m])
    return sum(outs) / NUM_MODELS


if __name__ == "__main__":
    # Small shapes consistent with an image-classifier ensemble.
    B, C, H, W = 2, 4, 16, 16
    HID, NC = 32, 10

    key = jax.random.PRNGKey(0)
    kx, k1, k2, k3, k4 = jax.random.split(key, 5)

    x = jax.random.normal(kx, (B, C, H, W), dtype=jnp.float32)
    w1 = 0.1 * jax.random.normal(k1, (NUM_MODELS, C, HID), dtype=jnp.float32)
    b1 = 0.1 * jax.random.normal(k2, (NUM_MODELS, HID), dtype=jnp.float32)
    w2 = 0.1 * jax.random.normal(k3, (NUM_MODELS, HID, NC), dtype=jnp.float32)
    b2 = 0.1 * jax.random.normal(k4, (NUM_MODELS, NC), dtype=jnp.float32)

    ref = _reference(x, w1, b1, w2, b2)

    # Exact-parity path (f32 operands): verifies the fused two-matmul structure.
    params_f32 = prepare_fusion_ensemble_params(
        w1, b1, w2, b2, compute_dtype=jnp.float32)
    out_f32 = jax.block_until_ready(fusion_ensemble_apply(x, params_f32))
    assert out_f32.shape == (B, NC)
    assert jnp.allclose(out_f32, ref, rtol=1e-3, atol=1e-3), "f32 mismatch"

    # Default fast path: bf16 MXU operands, f32 accumulation.
    params = prepare_fusion_ensemble_params(w1, b1, w2, b2)
    out = jax.block_until_ready(fusion_ensemble_apply(x, params))
    assert out.shape == (B, NC)
    assert jnp.allclose(out, ref, rtol=2e-2, atol=2e-2), "bf16 mismatch"

    print("KERNEL_OK")
</pallas_src>

<mosaic_0001>
module attributes {stable_mosaic.version = 11 : i64} {
  func.func @kernel(%arg0: i32, %arg1: memref<8x4xf32, #tpu.memory_space<vmem>>, %arg2: memref<4x512xf32, #tpu.memory_space<vmem>>, %arg3: memref<512x128xf32, #tpu.memory_space<vmem>>, %arg4: memref<1x640xf32, #tpu.memory_space<vmem>>, %arg5: memref<8x128xf32, #tpu.memory_space<vmem>>) attributes {dimension_semantics = [#tpu.dimension_semantics<parallel>], iteration_bounds = array<i64: 1>, scalar_prefetch = 0 : i64, scratch_operands = 0 : i64, tpu.core_type = #tpu.core_type<tc>, window_params = [{transform_indices = @transform_0, window_bounds = array<i64: 8, 4>}, {pipeline_mode = #tpu.pipeline_mode<synchronous>, transform_indices = @transform_1, window_bounds = array<i64: 4, 512>}, {pipeline_mode = #tpu.pipeline_mode<synchronous>, transform_indices = @transform_2, window_bounds = array<i64: 512, 128>}, {pipeline_mode = #tpu.pipeline_mode<synchronous>, transform_indices = @transform_3, window_bounds = array<i64: 1, 640>}, {transform_indices = @transform_4, window_bounds = array<i64: 8, 128>}]} {
    %c0 = arith.constant 0 : index
    %c0_0 = arith.constant 0 : index
    %0 = vector.load %arg4[%c0, %c0_0] : memref<1x640xf32, #tpu.memory_space<vmem>>, vector<1x512xf32>
    %c0_1 = arith.constant 0 : index
    %c512 = arith.constant 512 : index
    %1 = vector.load %arg4[%c0_1, %c512] : memref<1x640xf32, #tpu.memory_space<vmem>>, vector<1x128xf32>
    %c0_2 = arith.constant 0 : index
    %c0_3 = arith.constant 0 : index
    %2 = vector.load %arg1[%c0_2, %c0_3] : memref<8x4xf32, #tpu.memory_space<vmem>>, vector<8x4xf32>
    %c0_4 = arith.constant 0 : index
    %c0_5 = arith.constant 0 : index
    %3 = vector.load %arg2[%c0_4, %c0_5] : memref<4x512xf32, #tpu.memory_space<vmem>>, vector<4x512xf32>
    %cst = arith.constant dense<0.000000e+00> : vector<8x512xf32>
    %4 = tpu.matmul %2, %3, %cst {dimension_numbers = #tpu.dot_dimension_numbers<[1], [0], [0], [1], [0, 0, 1, 1], [], []>} : vector<8x4xf32>, vector<4x512xf32>, vector<8x512xf32> -> vector<8x512xf32>
    %5 = vector.broadcast %0 : vector<1x512xf32> to vector<8x512xf32>
    %6 = arith.addf %4, %5 : vector<8x512xf32>
    %cst_6 = arith.constant 0.000000e+00 : f32
    %7 = vector.broadcast %cst_6 : f32 to vector<8x512xf32>
    %8 = arith.maximumf %6, %7 : vector<8x512xf32>
    %c0_7 = arith.constant 0 : index
    %c0_8 = arith.constant 0 : index
    %9 = vector.load %arg3[%c0_7, %c0_8] : memref<512x128xf32, #tpu.memory_space<vmem>>, vector<512x128xf32>
    %cst_9 = arith.constant dense<0.000000e+00> : vector<8x128xf32>
    %10 = tpu.matmul %8, %9, %cst_9 {dimension_numbers = #tpu.dot_dimension_numbers<[1], [0], [0], [1], [0, 0, 1, 1], [], []>} : vector<8x512xf32>, vector<512x128xf32>, vector<8x128xf32> -> vector<8x128xf32>
    %11 = vector.broadcast %1 : vector<1x128xf32> to vector<8x128xf32>
    %12 = arith.addf %10, %11 : vector<8x128xf32>
    %c0_10 = arith.constant 0 : index
    %c0_11 = arith.constant 0 : index
    %13 = vector.load %arg5[%c0_10, %c0_11] : memref<8x128xf32, #tpu.memory_space<vmem>>, vector<8x128xf32>
    tpu.vector_store %arg5[%c0_10, %c0_11], %12 {strides = array<i32>} : memref<8x128xf32, #tpu.memory_space<vmem>>, vector<8x128xf32>,
    return
  }
  func.func @transform_0(%arg0: i32) -> (i32, i32) {
    %c0_i32 = arith.constant 0 : i32
    %c0_i32_0 = arith.constant 0 : i32
    return %arg0, %c0_i32 : i32, i32
  }
  func.func @transform_1(%arg0: i32) -> (i32, i32) {
    %c0_i32 = arith.constant 0 : i32
    %c0_i32_0 = arith.constant 0 : i32
    %c0_i32_1 = arith.constant 0 : i32
    return %c0_i32, %c0_i32_0 : i32, i32
  }
  func.func @transform_2(%arg0: i32) -> (i32, i32) {
    %c0_i32 = arith.constant 0 : i32
    %c0_i32_0 = arith.constant 0 : i32
    %c0_i32_1 = arith.constant 0 : i32
    return %c0_i32, %c0_i32_0 : i32, i32
  }
  func.func @transform_3(%arg0: i32) -> (i32, i32) {
    %c0_i32 = arith.constant 0 : i32
    %c0_i32_0 = arith.constant 0 : i32
    %c0_i32_1 = arith.constant 0 : i32
    return %c0_i32, %c0_i32_0 : i32, i32
  }
  func.func @transform_4(%arg0: i32) -> (i32, i32) {
    %c0_i32 = arith.constant 0 : i32
    %c0_i32_0 = arith.constant 0 : i32
    return %arg0, %c0_i32 : i32, i32
  }
}

module attributes {stable_mosaic.version = 11 : i64} {
  func.func @kernel(%arg0: i32, %arg1: memref<8x4xf32, #tpu.memory_space<vmem>>, %arg2: memref<4x512xf32, #tpu.memory_space<vmem>>, %arg3: memref<512x128xf32, #tpu.memory_space<vmem>>, %arg4: memref<1x640xf32, #tpu.memory_space<vmem>>, %arg5: memref<8x128xf32, #tpu.memory_space<vmem>>) attributes {dimension_semantics = [#tpu.dimension_semantics<parallel>], iteration_bounds = array<i64: 1>, scalar_prefetch = 0 : i64, scratch_operands = 0 : i64, tpu.core_type = #tpu.core_type<tc>, window_params = [{transform_indices = @transform_0, window_bounds = array<i64: 8, 4>}, {pipeline_mode = #tpu.pipeline_mode<synchronous>, transform_indices = @transform_1, window_bounds = array<i64: 4, 512>}, {pipeline_mode = #tpu.pipeline_mode<synchronous>, transform_indices = @transform_2, window_bounds = array<i64: 512, 128>}, {pipeline_mode = #tpu.pipeline_mode<synchronous>, transform_indices = @transform_3, window_bounds = array<i64: 1, 640>}, {transform_indices = @transform_4, window_bounds = array<i64: 8, 128>}]} {
    %c0 = arith.constant 0 : index
    %c0_0 = arith.constant 0 : index
    %0 = vector.load %arg4[%c0, %c0_0] : memref<1x640xf32, #tpu.memory_space<vmem>>, vector<1x512xf32>
    %c0_1 = arith.constant 0 : index
    %c512 = arith.constant 512 : index
    %1 = vector.load %arg4[%c0_1, %c512] : memref<1x640xf32, #tpu.memory_space<vmem>>, vector<1x128xf32>
    %c0_2 = arith.constant 0 : index
    %c0_3 = arith.constant 0 : index
    %2 = vector.load %arg1[%c0_2, %c0_3] : memref<8x4xf32, #tpu.memory_space<vmem>>, vector<8x4xf32>
    %c0_4 = arith.constant 0 : index
    %c0_5 = arith.constant 0 : index
    %3 = vector.load %arg2[%c0_4, %c0_5] : memref<4x512xf32, #tpu.memory_space<vmem>>, vector<4x512xf32>
    %cst = arith.constant dense<0.000000e+00> : vector<8x512xf32>
    %4 = tpu.matmul %2, %3, %cst {dimension_numbers = #tpu.dot_dimension_numbers<[1], [0], [0], [1], [0, 0, 1, 1], [], []>} : vector<8x4xf32>, vector<4x512xf32>, vector<8x512xf32> -> vector<8x512xf32>
    %5 = vector.broadcast %0 : vector<1x512xf32> to vector<8x512xf32>
    %6 = arith.addf %4, %5 : vector<8x512xf32>
    %cst_6 = arith.constant 0.000000e+00 : f32
    %7 = vector.broadcast %cst_6 : f32 to vector<8x512xf32>
    %8 = arith.maximumf %6, %7 : vector<8x512xf32>
    %c0_7 = arith.constant 0 : index
    %c0_8 = arith.constant 0 : index
    %9 = vector.load %arg3[%c0_7, %c0_8] : memref<512x128xf32, #tpu.memory_space<vmem>>, vector<512x128xf32>
    %cst_9 = arith.constant dense<0.000000e+00> : vector<8x128xf32>
    %10 = tpu.matmul %8, %9, %cst_9 {dimension_numbers = #tpu.dot_dimension_numbers<[1], [0], [0], [1], [0, 0, 1, 1], [], []>} : vector<8x512xf32>, vector<512x128xf32>, vector<8x128xf32> -> vector<8x128xf32>
    %11 = vector.broadcast %1 : vector<1x128xf32> to vector<8x128xf32>
    %12 = arith.addf %10, %11 : vector<8x128xf32>
    %c0_10 = arith.constant 0 : index
    %c0_11 = arith.constant 0 : index
    %13 = vector.load %arg5[%c0_10, %c0_11] : memref<8x128xf32, #tpu.memory_space<vmem>>, vector<8x128xf32>
    tpu.vector_store %arg5[%c0_10, %c0_11], %12 {strides = array<i32>} : memref<8x128xf32, #tpu.memory_space<vmem>>, vector<8x128xf32>,
    return
  }
  func.func @transform_0(%arg0: i32) -> (i32, i32) {
    %c0_i32 = arith.constant 0 : i32
    %c0_i32_0 = arith.constant 0 : i32
    return %arg0, %c0_i32 : i32, i32
  }
  func.func @transform_1(%arg0: i32) -> (i32, i32) {
    %c0_i32 = arith.constant 0 : i32
    %c0_i32_0 = arith.constant 0 : i32
    %c0_i32_1 = arith.constant 0 : i32
    return %c0_i32, %c0_i32_0 : i32, i32
  }
  func.func @transform_2(%arg0: i32) -> (i32, i32) {
    %c0_i32 = arith.constant 0 : i32
    %c0_i32_0 = arith.constant 0 : i32
    %c0_i32_1 = arith.constant 0 : i32
    return %c0_i32, %c0_i32_0 : i32, i32
  }
  func.func @transform_3(%arg0: i32) -> (i32, i32) {
    %c0_i32 = arith.constant 0 : i32
    %c0_i32_0 = arith.constant 0 : i32
    %c0_i32_1 = arith.constant 0 : i32
    return %c0_i32, %c0_i32_0 : i32, i32
  }
  func.func @transform_4(%arg0: i32) -> (i32, i32) {
    %c0_i32 = arith.constant 0 : i32
    %c0_i32_0 = arith.constant 0 : i32
    return %arg0, %c0_i32 : i32, i32
  }
}

</mosaic_0001>

<llo_original>
// kernel: tpu_custom_call.1
$region0: #{tpu_custom_call.1}
  #allocation0 [shape = 'u32[]', space=smem, size = 0x4, offset = 0x4, fixed_abs, tag = 'smem constant byte address 0x4 - core index']
  #allocation1 [shape = 'u32[144,128]{1,0:T(1,128)}', space=vmem, size = 0x12000, scoped, tag = 'internal scratch']
  %s0 = inlined_call_operand.vmem [shape: f32[8,4], index: 0, kind: input, shape index: {}]
  %s1 = inlined_call_operand.hbm [shape: f32[4,512], index: 1, kind: input, shape index: {}]
  %s2 = inlined_call_operand.hbm [shape: f32[512,128], index: 2, kind: input, shape index: {}]
  %s3 = inlined_call_operand.vmem [shape: f32[1,640], index: 3, kind: input, shape index: {}]
  %s4 = inlined_call_operand.hbm [shape: f32[8,128], index: 4, kind: output, shape index: {}]
  %s5 = sld [smem:[#allocation0]]
  $region34: #{tpu_custom_call.1} parent=0
    _
  %s7 = ssub.s32 1, %s5
  %s8 = scalar_select 0, %s7, %s5
  $region1: #{tpu_custom_call.1} parent=0
    #allocation2 [shape = 'u8[8192]{0}', space=vmem, size = 0x2000, scoped, tag = 'input window, operand 1, single buffered']
    #allocation3 [shape = 's32[1]{0}', space=sflag, size = 0x4, scoped, tag = 'scoped memory for tpu_custom_call.1']
    #allocation4 [shape = 's32[1]{0}', space=sflag, size = 0x4, scoped, tag = 'scoped memory for tpu_custom_call.1']
    #allocation5 [shape = 'u8[262144]{0}', space=vmem, size = 0x40000, scoped, tag = 'input window, operand 2, single buffered']
    #allocation6 [shape = 's32[1]{0}', space=sflag, size = 0x4, scoped, tag = 'scoped memory for tpu_custom_call.1']
    #allocation7 [shape = 'u8[4096]{0}', space=vmem, size = 0x1000, scoped, tag = 'output window, operand 0, single buffered']
    %9 = vsyncpa [#allocation3], 0
    %10 = vsyncpa [#allocation6], 0
    %11 = vsyncpa [#allocation4], 0
    // Predicated region
    $region2: #{tpu_custom_call.1} parent=1 // pred_check
      _
    $region3: #{tpu_custom_call.1} parent=1 // pred_check_branch
      %13 = sbr.rel (0) target = $region5
    $region4: #{tpu_custom_call.1} parent=1 // pred_region
      _
    $region5: #{tpu_custom_call.1} parent=1 // pred_fallthru
      _
    // Predicated region
    $region6: #{tpu_custom_call.1} parent=1 // pred_check
      _
    $region7: #{tpu_custom_call.1} parent=1 // pred_check_branch
      %15 = sbr.rel (0) target = $region9
    $region8: #{tpu_custom_call.1} parent=1 // pred_region
      %s17 = ssub.s32 256, 256
      %18 = vsyncadd [#allocation3], %s17
      %s20 = sshll.u32 [#allocation2], 4
      %s21 = int_to_ptr.vmem [resolvable:$true] %s20
      %23 = dma.hbm_to_vmem [thread:$0]  %s1, 256, %s21, [#allocation3]
    $region9: #{tpu_custom_call.1} parent=1 // pred_fallthru
      _
    // Predicated region
    $region10: #{tpu_custom_call.1} parent=1 // pred_check
      _
    $region11: #{tpu_custom_call.1} parent=1 // pred_check_branch
      %25 = sbr.rel (0) target = $region13
    $region12: #{tpu_custom_call.1} parent=1 // pred_region
      %s27 = ssub.s32 8192, 8192
      %28 = vsyncadd [#allocation6], %s27
      %s29 = sshll.u32 [#allocation5], 4
      %s30 = int_to_ptr.vmem [resolvable:$true] %s29
      %35 = dma.hbm_to_vmem [thread:$0]  %s2, 8192, %s30, [#allocation6], 128, 128, 8
    $region13: #{tpu_custom_call.1} parent=1 // pred_fallthru
      _
    // Predicated region
    $region14: #{tpu_custom_call.1} parent=1 // pred_check
      _
    $region15: #{tpu_custom_call.1} parent=1 // pred_check_branch
      %37 = sbr.rel (0) target = $region17
    $region16: #{tpu_custom_call.1} parent=1 // pred_region
      _
    $region17: #{tpu_custom_call.1} parent=1 // pred_fallthru
      _
    // Predicated region
    $region18: #{tpu_custom_call.1} parent=1 // pred_check
      _
    $region19: #{tpu_custom_call.1} parent=1 // pred_check_branch
      %39 = sbr.rel (0) target = $region21
    $region20: #{tpu_custom_call.1} parent=1 // pred_region
      %40 = dma.done [#allocation3], 256
    $region21: #{tpu_custom_call.1} parent=1 // pred_fallthru
      _
    // Predicated region
    $region22: #{tpu_custom_call.1} parent=1 // pred_check
      _
    $region23: #{tpu_custom_call.1} parent=1 // pred_check_branch
      %42 = sbr.rel (0) target = $region25
    $region24: #{tpu_custom_call.1} parent=1 // pred_region
      %43 = dma.done [#allocation6], 8192
    $region25: #{tpu_custom_call.1} parent=1 // pred_fallthru
      _
    %v44 = vld [vmem:[%s3] sm:$0xf]
    %v45 = vld [vmem:[%s3 + $0x4] sm:$0x1]
    %v46 = vld [vmem:[%s0] sm:$0xff]
    %v47 = vld [vmem:[#allocation2] sm:$0xff]
    %v48 = vld [vmem:[#allocation2 + $0x8] sm:$0xff]
    %v50 = vlaneseq
    %v51 = vshrl.u32 %v50, 7
    %v52 = vsub.s32 0, %v51
    %v53 = vrot.slane %v44, %v52
    %v54 = vlaneseq
    %v55 = vshrl.u32 %v54, 7
    %v56 = vsub.s32 1, %v55
    %v57 = vrot.slane %v44, %v56
    %v58 = vlaneseq
    %v59 = vshrl.u32 %v58, 7
    %v60 = vsub.s32 2, %v59
    %v61 = vrot.slane %v44, %v60
    %v62 = vlaneseq
    %v63 = vshrl.u32 %v62, 7
    %v64 = vsub.s32 3, %v63
    %v65 = vrot.slane %v44, %v64
    %v72 = vcombine.high %v47, %v47
    %v73 = vcombine.high %v48, %v48
    %vm74 = vcmask 31744
    %v76 = vsel %vm74, %v46, 0
    %vm78 = vcmask 1043456
    %v79 = vsel %vm78, %v47, 0
    %v81 = vsel %vm78, %v72, 0
    %v83 = vsel %vm78, %v48, 0
    %v85 = vsel %vm78, %v73, 0
    %87 = vmatprep.subr.mxu0 %v81
    %88 = vmatpush1.msra.mxu0 %v79
    %89 = vmatprep.subr.mxu0 0.0
    %90 = vmatpush1.msra.mxu0 0.0
    %91 = vmatprep.subr.mxu0 0.0
    %92 = vmatpush1.msra.mxu0 0.0
    %93 = vmatprep.subr.mxu0 0.0
    %94 = vmatpush1.msra.mxu0 0.0
    %95 = vmatprep.subr.mxu0 0.0
    %96 = vmatpush1.msra.mxu0 0.0
    %97 = vmatprep.subr.mxu0 0.0
    %98 = vmatpush1.msra.mxu0 0.0
    %99 = vmatprep.subr.mxu0 0.0
    %100 = vmatpush1.msra.mxu0 0.0
    %101 = vmatprep.subr.mxu0 0.0
    %102 = vmatpush1.msra.mxu0 0.0
    %103 = vmatprep.subr.mxu0 0.0
    %104 = vmatpush1.msra.mxu0 0.0
    %105 = vmatprep.subr.mxu0 0.0
    %106 = vmatpush1.msra.mxu0 0.0
    %107 = vmatprep.subr.mxu0 0.0
    %108 = vmatpush1.msra.mxu0 0.0
    %109 = vmatprep.subr.mxu0 0.0
    %110 = vmatpush1.msra.mxu0 0.0
    %111 = vmatprep.subr.mxu0 0.0
    %112 = vmatpush1.msra.mxu0 0.0
    %113 = vmatprep.subr.mxu0 0.0
    %114 = vmatpush1.msra.mxu0 0.0
    %115 = vmatprep.subr.mxu0 0.0
    %116 = vmatpush1.msra.mxu0 0.0
    %117 = vmatprep.subr.mxu0 0.0
    %118 = vmatpush1.msra.mxu0 0.0
    %119 = vmatprep.subr.mxu0 0.0
    %120 = vmatpush1.msra.mxu0 0.0
    %121 = vmatprep.subr.mxu0 0.0
    %122 = vmatpush1.msra.mxu0 0.0
    %123 = vmatprep.subr.mxu0 0.0
    %124 = vmatpush1.msra.mxu0 0.0
    %125 = vmatprep.subr.mxu0 0.0
    %126 = vmatpush1.msra.mxu0 0.0
    %127 = vmatprep.subr.mxu0 0.0
    %128 = vmatpush1.msra.mxu0 0.0
    %129 = vmatprep.subr.mxu0 0.0
    %130 = vmatpush1.msra.mxu0 0.0
    %131 = vmatprep.subr.mxu0 0.0
    %132 = vmatpush1.msra.mxu0 0.0
    %133 = vmatprep.subr.mxu0 0.0
    %134 = vmatpush1.msra.mxu0 0.0
    %135 = vmatprep.subr.mxu0 0.0
    %136 = vmatpush1.msra.mxu0 0.0
    %137 = vmatprep.subr.mxu0 0.0
    %138 = vmatpush1.msra.mxu0 0.0
    %139 = vmatprep.subr.mxu0 0.0
    %140 = vmatpush1.msra.mxu0 0.0
    %141 = vmatprep.subr.mxu0 0.0
    %142 = vmatpush1.msra.mxu0 0.0
    %143 = vmatprep.subr.mxu0 0.0
    %144 = vmatpush1.msra.mxu0 0.0
    %145 = vmatprep.subr.mxu0 0.0
    %146 = vmatpush1.msra.mxu0 0.0
    %147 = vmatprep.subr.mxu0 0.0
    %148 = vmatpush1.msra.mxu0 0.0
    %149 = vmatprep.subr.mxu0 0.0
    %150 = vmatpush1.msra.mxu0 0.0
    %151 = vmatprep.mubr.f32.mxu0 0.0
    %152 = vmatmul.mubr.f32.gmra.mrb[0].mxu0 %v76
    %v153 = vpop.f32.mrb[0].mxu0
    %v154 = vadd.f32 %v53, %v153
    %v155 = vpop.f32.mrb[0].mxu0
    %v156 = vadd.f32 %v57, %v155
    %157 = vdwg.mxu0
    %158 = vmatprep.subr.mxu0 %v85
    %159 = vmatpush1.msra.mxu0 %v83
    %160 = vmatprep.subr.mxu0 0.0
    %161 = vmatpush1.msra.mxu0 0.0
    %162 = vmatprep.subr.mxu0 0.0
    %163 = vmatpush1.msra.mxu0 0.0
    %164 = vmatprep.subr.mxu0 0.0
    %165 = vmatpush1.msra.mxu0 0.0
    %166 = vmatprep.subr.mxu0 0.0
    %167 = vmatpush1.msra.mxu0 0.0
    %168 = vmatprep.subr.mxu0 0.0
    %169 = vmatpush1.msra.mxu0 0.0
    %170 = vmatprep.subr.mxu0 0.0
    %171 = vmatpush1.msra.mxu0 0.0
    %172 = vmatprep.subr.mxu0 0.0
    %173 = vmatpush1.msra.mxu0 0.0
    %174 = vmatprep.subr.mxu0 0.0
    %175 = vmatpush1.msra.mxu0 0.0
    %176 = vmatprep.subr.mxu0 0.0
    %177 = vmatpush1.msra.mxu0 0.0
    %178 = vmatprep.subr.mxu0 0.0
    %179 = vmatpush1.msra.mxu0 0.0
    %180 = vmatprep.subr.mxu0 0.0
    %181 = vmatpush1.msra.mxu0 0.0
    %182 = vmatprep.subr.mxu0 0.0
    %183 = vmatpush1.msra.mxu0 0.0
    %184 = vmatprep.subr.mxu0 0.0
    %185 = vmatpush1.msra.mxu0 0.0
    %186 = vmatprep.subr.mxu0 0.0
    %187 = vmatpush1.msra.mxu0 0.0
    %188 = vmatprep.subr.mxu0 0.0
    %189 = vmatpush1.msra.mxu0 0.0
    %190 = vmatprep.subr.mxu0 0.0
    %191 = vmatpush1.msra.mxu0 0.0
    %192 = vmatprep.subr.mxu0 0.0
    %193 = vmatpush1.msra.mxu0 0.0
    %194 = vmatprep.subr.mxu0 0.0
    %195 = vmatpush1.msra.mxu0 0.0
    %196 = vmatprep.subr.mxu0 0.0
    %197 = vmatpush1.msra.mxu0 0.0
    %198 = vmatprep.subr.mxu0 0.0
    %199 = vmatpush1.msra.mxu0 0.0
    %200 = vmatprep.subr.mxu0 0.0
    %201 = vmatpush1.msra.mxu0 0.0
    %202 = vmatprep.subr.mxu0 0.0
    %203 = vmatpush1.msra.mxu0 0.0
    %204 = vmatprep.subr.mxu0 0.0
    %205 = vmatpush1.msra.mxu0 0.0
    %206 = vmatprep.subr.mxu0 0.0
    %207 = vmatpush1.msra.mxu0 0.0
    %208 = vmatprep.subr.mxu0 0.0
    %209 = vmatpush1.msra.mxu0 0.0
    %210 = vmatprep.subr.mxu0 0.0
    %211 = vmatpush1.msra.mxu0 0.0
    %212 = vmatprep.subr.mxu0 0.0
    %213 = vmatpush1.msra.mxu0 0.0
    %214 = vmatprep.subr.mxu0 0.0
    %215 = vmatpush1.msra.mxu0 0.0
    %216 = vmatprep.subr.mxu0 0.0
    %217 = vmatpush1.msra.mxu0 0.0
    %218 = vmatprep.subr.mxu0 0.0
    %219 = vmatpush1.msra.mxu0 0.0
    %220 = vmatprep.subr.mxu0 0.0
    %221 = vmatpush1.msra.mxu0 0.0
    %222 = vmatprep.mubr.f32.mxu0 0.0
    %223 = vmatmul.mubr.f32.gmra.mrb[0].mxu0 %v76
    %v224 = vpop.f32.mrb[0].mxu0
    %v225 = vadd.f32 %v61, %v224
    %v226 = vpop.f32.mrb[0].mxu0
    %v227 = vadd.f32 %v65, %v226
    %228 = vdwg.mxu0
    %v229 = vmax.f32 %v154, 0.0
    %v230 = vmax.f32 %v156, 0.0
    %v231 = vmax.f32 %v225, 0.0
    %v232 = vmax.f32 %v227, 0.0
    %v233 = vld [vmem:[#allocation5] sm:$0xff]
    %v234 = vld [vmem:[#allocation5 + $0x8] sm:$0xff]
    %v235 = vld [vmem:[#allocation5 + $0x10] sm:$0xff]
    %v236 = vld [vmem:[#allocation5 + $0x18] sm:$0xff]
    %v237 = vld [vmem:[#allocation5 + $0x20] sm:$0xff]
    %v238 = vld [vmem:[#allocation5 + $0x28] sm:$0xff]
    %v239 = vld [vmem:[#allocation5 + $0x30] sm:$0xff]
    %v240 = vld [vmem:[#allocation5 + $0x38] sm:$0xff]
    %v241 = vld [vmem:[#allocation5 + $0x40] sm:$0xff]
    %v242 = vld [vmem:[#allocation5 + $0x48] sm:$0xff]
    %v243 = vld [vmem:[#allocation5 + $0x50] sm:$0xff]
    %v244 = vld [vmem:[#allocation5 + $0x58] sm:$0xff]
    %v245 = vld [vmem:[#allocation5 + $0x60] sm:$0xff]
    %v246 = vld [vmem:[#allocation5 + $0x68] sm:$0xff]
    %v247 = vld [vmem:[#allocation5 + $0x70] sm:$0xff]
    %v248 = vld [vmem:[#allocation5 + $0x78] sm:$0xff]
    %v249 = vld [vmem:[#allocation5 + $0x80] sm:$0xff]
    %v250 = vld [vmem:[#allocation5 + $0x88] sm:$0xff]
    %v251 = vld [vmem:[#allocation5 + $0x90] sm:$0xff]
    %v252 = vld [vmem:[#allocation5 + $0x98] sm:$0xff]
    %v253 = vld [vmem:[#allocation5 + $0xa0] sm:$0xff]
    %v254 = vld [vmem:[#allocation5 + $0xa8] sm:$0xff]
    %v255 = vld [vmem:[#allocation5 + $0xb0] sm:$0xff]
    %v256 = vld [vmem:[#allocation5 + $0xb8] sm:$0xff]
    %v257 = vld [vmem:[#allocation5 + $0xc0] sm:$0xff]
    %v258 = vld [vmem:[#allocation5 + $0xc8] sm:$0xff]
    %v259 = vld [vmem:[#allocation5 + $0xd0] sm:$0xff]
    %v260 = vld [vmem:[#allocation5 + $0xd8] sm:$0xff]
    %v261 = vld [vmem:[#allocation5 + $0xe0] sm:$0xff]
    %v262 = vld [vmem:[#allocation5 + $0xe8] sm:$0xff]
    %v263 = vld [vmem:[#allocation5 + $0xf0] sm:$0xff]
    %v264 = vld [vmem:[#allocation5 + $0xf8] sm:$0xff]
    %v265 = vld [vmem:[#allocation5 + $0x100] sm:$0xff]
    %v266 = vld [vmem:[#allocation5 + $0x108] sm:$0xff]
    %v267 = vld [vmem:[#allocation5 + $0x110] sm:$0xff]
    %v268 = vld [vmem:[#allocation5 + $0x118] sm:$0xff]
    %v269 = vld [vmem:[#allocation5 + $0x120] sm:$0xff]
    %v270 = vld [vmem:[#allocation5 + $0x128] sm:$0xff]
    %v271 = vld [vmem:[#allocation5 + $0x130] sm:$0xff]
    %v272 = vld [vmem:[#allocation5 + $0x138] sm:$0xff]
    %v273 = vld [vmem:[#allocation5 + $0x140] sm:$0xff]
    %v274 = vld [vmem:[#allocation5 + $0x148] sm:$0xff]
    %v275 = vld [vmem:[#allocation5 + $0x150] sm:$0xff]
    %v276 = vld [vmem:[#allocation5 + $0x158] sm:$0xff]
    %v277 = vld [vmem:[#allocation5 + $0x160] sm:$0xff]
    %v278 = vld [vmem:[#allocation5 + $0x168] sm:$0xff]
    %v279 = vld [vmem:[#allocation5 + $0x170] sm:$0xff]
    %v280 = vld [vmem:[#allocation5 + $0x178] sm:$0xff]
    %v281 = vld [vmem:[#allocation5 + $0x180] sm:$0xff]
    %v282 = vld [vmem:[#allocation5 + $0x188] sm:$0xff]
    %v283 = vld [vmem:[#allocation5 + $0x190] sm:$0xff]
    %v284 = vld [vmem:[#allocation5 + $0x198] sm:$0xff]
    %v285 = vld [vmem:[#allocation5 + $0x1a0] sm:$0xff]
    %v286 = vld [vmem:[#allocation5 + $0x1a8] sm:$0xff]
    %v287 = vld [vmem:[#allocation5 + $0x1b0] sm:$0xff]
    %v288 = vld [vmem:[#allocation5 + $0x1b8] sm:$0xff]
    %v289 = vld [vmem:[#allocation5 + $0x1c0] sm:$0xff]
    %v290 = vld [vmem:[#allocation5 + $0x1c8] sm:$0xff]
    %v291 = vld [vmem:[#allocation5 + $0x1d0] sm:$0xff]
    %v292 = vld [vmem:[#allocation5 + $0x1d8] sm:$0xff]
    %v293 = vld [vmem:[#allocation5 + $0x1e0] sm:$0xff]
    %v294 = vld [vmem:[#allocation5 + $0x1e8] sm:$0xff]
    %v295 = vld [vmem:[#allocation5 + $0x1f0] sm:$0xff]
    %v296 = vld [vmem:[#allocation5 + $0x1f8] sm:$0xff]
    %v298 = vlaneseq
    %v299 = vshrl.u32 %v298, 7
    %v300 = vsub.s32 0, %v299
    %v301 = vrot.slane %v45, %v300
    %303 = vmatprep.subr.mxu0 0.0
    %304 = vmatpush1.msra.mxu0 %v233
    %305 = vmatprep.subr.mxu0 0.0
    %306 = vmatpush1.msra.mxu0 %v234
    %307 = vmatprep.subr.mxu0 0.0
    %308 = vmatpush1.msra.mxu0 %v235
    %309 = vmatprep.subr.mxu0 0.0
    %310 = vmatpush1.msra.mxu0 %v236
    %311 = vmatprep.subr.mxu0 0.0
    %312 = vmatpush1.msra.mxu0 %v237
    %313 = vmatprep.subr.mxu0 0.0
    %314 = vmatpush1.msra.mxu0 %v238
    %315 = vmatprep.subr.mxu0 0.0
    %316 = vmatpush1.msra.mxu0 %v239
    %317 = vmatprep.subr.mxu0 0.0
    %318 = vmatpush1.msra.mxu0 %v240
    %319 = vmatprep.subr.mxu0 0.0
    %320 = vmatpush1.msra.mxu0 %v241
    %321 = vmatprep.subr.mxu0 0.0
    %322 = vmatpush1.msra.mxu0 %v242
    %323 = vmatprep.subr.mxu0 0.0
    %324 = vmatpush1.msra.mxu0 %v243
    %325 = vmatprep.subr.mxu0 0.0
    %326 = vmatpush1.msra.mxu0 %v244
    %327 = vmatprep.subr.mxu0 0.0
    %328 = vmatpush1.msra.mxu0 %v245
    %329 = vmatprep.subr.mxu0 0.0
    %330 = vmatpush1.msra.mxu0 %v246
    %331 = vmatprep.subr.mxu0 0.0
    %332 = vmatpush1.msra.mxu0 %v247
    %333 = vmatprep.subr.mxu0 0.0
    %334 = vmatpush1.msra.mxu0 %v248
    %335 = vmatprep.subr.mxu0 0.0
    %336 = vmatpush1.msra.mxu0 %v249
    %337 = vmatprep.subr.mxu0 0.0
    %338 = vmatpush1.msra.mxu0 %v250
    %339 = vmatprep.subr.mxu0 0.0
    %340 = vmatpush1.msra.mxu0 %v251
    %341 = vmatprep.subr.mxu0 0.0
    %342 = vmatpush1.msra.mxu0 %v252
    %343 = vmatprep.subr.mxu0 0.0
    %344 = vmatpush1.msra.mxu0 %v253
    %345 = vmatprep.subr.mxu0 0.0
    %346 = vmatpush1.msra.mxu0 %v254
    %347 = vmatprep.subr.mxu0 0.0
    %348 = vmatpush1.msra.mxu0 %v255
    %349 = vmatprep.subr.mxu0 0.0
    %350 = vmatpush1.msra.mxu0 %v256
    %351 = vmatprep.subr.mxu0 0.0
    %352 = vmatpush1.msra.mxu0 %v257
    %353 = vmatprep.subr.mxu0 0.0
    %354 = vmatpush1.msra.mxu0 %v258
    %355 = vmatprep.subr.mxu0 0.0
    %356 = vmatpush1.msra.mxu0 %v259
    %357 = vmatprep.subr.mxu0 0.0
    %358 = vmatpush1.msra.mxu0 %v260
    %359 = vmatprep.subr.mxu0 0.0
    %360 = vmatpush1.msra.mxu0 %v261
    %361 = vmatprep.subr.mxu0 0.0
    %362 = vmatpush1.msra.mxu0 %v262
    %363 = vmatprep.subr.mxu0 0.0
    %364 = vmatpush1.msra.mxu0 %v263
    %365 = vmatprep.subr.mxu0 0.0
    %366 = vmatpush1.msra.mxu0 %v264
    %367 = vmatprep.mubr.f32.mxu0 %v230
    %368 = vmatmul.mubr.f32.gmra.mrb[0].mxu0 %v229
    %v369 = vpop.f32.mrb[0].mxu0
    %v370 = vadd.f32 %v301, %v369
    %v371 = vpop.f32.mrb[0].mxu0
    %372 = vdwg.mxu0
    %373 = vmatprep.subr.mxu0 0.0
    %374 = vmatpush1.msra.mxu0 %v265
    %375 = vmatprep.subr.mxu0 0.0
    %376 = vmatpush1.msra.mxu0 %v266
    %377 = vmatprep.subr.mxu0 0.0
    %378 = vmatpush1.msra.mxu0 %v267
    %379 = vmatprep.subr.mxu0 0.0
    %380 = vmatpush1.msra.mxu0 %v268
    %381 = vmatprep.subr.mxu0 0.0
    %382 = vmatpush1.msra.mxu0 %v269
    %383 = vmatprep.subr.mxu0 0.0
    %384 = vmatpush1.msra.mxu0 %v270
    %385 = vmatprep.subr.mxu0 0.0
    %386 = vmatpush1.msra.mxu0 %v271
    %387 = vmatprep.subr.mxu0 0.0
    %388 = vmatpush1.msra.mxu0 %v272
    %389 = vmatprep.subr.mxu0 0.0
    %390 = vmatpush1.msra.mxu0 %v273
    %391 = vmatprep.subr.mxu0 0.0
    %392 = vmatpush1.msra.mxu0 %v274
    %393 = vmatprep.subr.mxu0 0.0
    %394 = vmatpush1.msra.mxu0 %v275
    %395 = vmatprep.subr.mxu0 0.0
    %396 = vmatpush1.msra.mxu0 %v276
    %397 = vmatprep.subr.mxu0 0.0
    %398 = vmatpush1.msra.mxu0 %v277
    %399 = vmatprep.subr.mxu0 0.0
    %400 = vmatpush1.msra.mxu0 %v278
    %401 = vmatprep.subr.mxu0 0.0
    %402 = vmatpush1.msra.mxu0 %v279
    %403 = vmatprep.subr.mxu0 0.0
    %404 = vmatpush1.msra.mxu0 %v280
    %405 = vmatprep.subr.mxu0 0.0
    %406 = vmatpush1.msra.mxu0 %v281
    %407 = vmatprep.subr.mxu0 0.0
    %408 = vmatpush1.msra.mxu0 %v282
    %409 = vmatprep.subr.mxu0 0.0
    %410 = vmatpush1.msra.mxu0 %v283
    %411 = vmatprep.subr.mxu0 0.0
    %412 = vmatpush1.msra.mxu0 %v284
    %413 = vmatprep.subr.mxu0 0.0
    %414 = vmatpush1.msra.mxu0 %v285
    %415 = vmatprep.subr.mxu0 0.0
    %416 = vmatpush1.msra.mxu0 %v286
    %417 = vmatprep.subr.mxu0 0.0
    %418 = vmatpush1.msra.mxu0 %v287
    %419 = vmatprep.subr.mxu0 0.0
    %420 = vmatpush1.msra.mxu0 %v288
    %421 = vmatprep.subr.mxu0 0.0
    %422 = vmatpush1.msra.mxu0 %v289
    %423 = vmatprep.subr.mxu0 0.0
    %424 = vmatpush1.msra.mxu0 %v290
    %425 = vmatprep.subr.mxu0 0.0
    %426 = vmatpush1.msra.mxu0 %v291
    %427 = vmatprep.subr.mxu0 0.0
    %428 = vmatpush1.msra.mxu0 %v292
    %429 = vmatprep.subr.mxu0 0.0
    %430 = vmatpush1.msra.mxu0 %v293
    %431 = vmatprep.subr.mxu0 0.0
    %432 = vmatpush1.msra.mxu0 %v294
    %433 = vmatprep.subr.mxu0 0.0
    %434 = vmatpush1.msra.mxu0 %v295
    %435 = vmatprep.subr.mxu0 0.0
    %436 = vmatpush1.msra.mxu0 %v296
    %437 = vmatprep.mubr.f32.mxu0 %v232
    %438 = vmatmul.mubr.f32.gmra.mrb[0].mxu0 %v231
    %v439 = vpop.f32.mrb[0].mxu0
    %v440 = vadd.f32 %v370, %v439
    %v441 = vpop.f32.mrb[0].mxu0
    %442 = vdwg.mxu0
    %443 = vst [vmem:[#allocation7] sm:$0xff] %v440
    // Predicated region
    $region26: #{tpu_custom_call.1} parent=1 // pred_check
      _
    $region27: #{tpu_custom_call.1} parent=1 // pred_check_branch
      %445 = sbr.rel (0) target = $region29
    $region28: #{tpu_custom_call.1} parent=1 // pred_region
      %s447 = ssub.s32 128, 128
      %448 = vsyncadd [#allocation4], %s447
      %s450 = sshll.u32 [#allocation7], 4
      %s451 = int_to_ptr.vmem [resolvable:$true] %s450
      %453 = dma.vmem_to_hbm [thread:$0]  %s451, 128, %s4, [#allocation4]
    $region29: #{tpu_custom_call.1} parent=1 // pred_fallthru
      _
    // Predicated region
    $region30: #{tpu_custom_call.1} parent=1 // pred_check
      _
    $region31: #{tpu_custom_call.1} parent=1 // pred_check_branch
      %455 = sbr.rel (0) target = $region33
    $region32: #{tpu_custom_call.1} parent=1 // pred_region
      %456 = dma.done [#allocation4], 128
    $region33: #{tpu_custom_call.1} parent=1 // pred_fallthru
      _
    %457 = vsyncpa [#allocation3], 1
    %458 = vsyncpa [#allocation6], 1
    %459 = vsyncpa [#allocation4], 1

// kernel: tpu_custom_call.1
$region0: #{tpu_custom_call.1}
  #allocation0 [shape = 'u32[]', space=smem, size = 0x4, offset = 0x4, fixed_abs, tag = 'smem constant byte address 0x4 - core index']
  #allocation1 [shape = 'u32[144,128]{1,0:T(1,128)}', space=vmem, size = 0x12000, scoped, tag = 'internal scratch']
  %s0 = inlined_call_operand.vmem [shape: f32[8,4], index: 0, kind: input, shape index: {}]
  %s1 = inlined_call_operand.hbm [shape: f32[4,512], index: 1, kind: input, shape index: {}]
  %s2 = inlined_call_operand.hbm [shape: f32[512,128], index: 2, kind: input, shape index: {}]
  %s3 = inlined_call_operand.vmem [shape: f32[1,640], index: 3, kind: input, shape index: {}]
  %s4 = inlined_call_operand.hbm [shape: f32[8,128], index: 4, kind: output, shape index: {}]
  %s5 = sld [smem:[#allocation0]]
  $region34: #{tpu_custom_call.1} parent=0
    _
  %s7 = ssub.s32 1, %s5
  %s8 = scalar_select 0, %s7, %s5
  $region1: #{tpu_custom_call.1} parent=0
    #allocation2 [shape = 'u8[8192]{0}', space=vmem, size = 0x2000, scoped, tag = 'input window, operand 1, single buffered']
    #allocation3 [shape = 's32[1]{0}', space=sflag, size = 0x4, scoped, tag = 'scoped memory for tpu_custom_call.1']
    #allocation4 [shape = 's32[1]{0}', space=sflag, size = 0x4, scoped, tag = 'scoped memory for tpu_custom_call.1']
    #allocation5 [shape = 'u8[262144]{0}', space=vmem, size = 0x40000, scoped, tag = 'input window, operand 2, single buffered']
    #allocation6 [shape = 's32[1]{0}', space=sflag, size = 0x4, scoped, tag = 'scoped memory for tpu_custom_call.1']
    #allocation7 [shape = 'u8[4096]{0}', space=vmem, size = 0x1000, scoped, tag = 'output window, operand 0, single buffered']
    %9 = vsyncpa [#allocation3], 0
    %10 = vsyncpa [#allocation6], 0
    %11 = vsyncpa [#allocation4], 0
    // Predicated region
    $region2: #{tpu_custom_call.1} parent=1 // pred_check
      _
    $region3: #{tpu_custom_call.1} parent=1 // pred_check_branch
      %13 = sbr.rel (0) target = $region5
    $region4: #{tpu_custom_call.1} parent=1 // pred_region
      _
    $region5: #{tpu_custom_call.1} parent=1 // pred_fallthru
      _
    // Predicated region
    $region6: #{tpu_custom_call.1} parent=1 // pred_check
      _
    $region7: #{tpu_custom_call.1} parent=1 // pred_check_branch
      %15 = sbr.rel (0) target = $region9
    $region8: #{tpu_custom_call.1} parent=1 // pred_region
      %s17 = ssub.s32 256, 256
      %18 = vsyncadd [#allocation3], %s17
      %s20 = sshll.u32 [#allocation2], 4
      %s21 = int_to_ptr.vmem [resolvable:$true] %s20
      %23 = dma.hbm_to_vmem [thread:$0]  %s1, 256, %s21, [#allocation3]
    $region9: #{tpu_custom_call.1} parent=1 // pred_fallthru
      _
    // Predicated region
    $region10: #{tpu_custom_call.1} parent=1 // pred_check
      _
    $region11: #{tpu_custom_call.1} parent=1 // pred_check_branch
      %25 = sbr.rel (0) target = $region13
    $region12: #{tpu_custom_call.1} parent=1 // pred_region
      %s27 = ssub.s32 8192, 8192
      %28 = vsyncadd [#allocation6], %s27
      %s29 = sshll.u32 [#allocation5], 4
      %s30 = int_to_ptr.vmem [resolvable:$true] %s29
      %35 = dma.hbm_to_vmem [thread:$0]  %s2, 8192, %s30, [#allocation6], 128, 128, 8
    $region13: #{tpu_custom_call.1} parent=1 // pred_fallthru
      _
    // Predicated region
    $region14: #{tpu_custom_call.1} parent=1 // pred_check
      _
    $region15: #{tpu_custom_call.1} parent=1 // pred_check_branch
      %37 = sbr.rel (0) target = $region17
    $region16: #{tpu_custom_call.1} parent=1 // pred_region
      _
    $region17: #{tpu_custom_call.1} parent=1 // pred_fallthru
      _
    // Predicated region
    $region18: #{tpu_custom_call.1} parent=1 // pred_check
      _
    $region19: #{tpu_custom_call.1} parent=1 // pred_check_branch
      %39 = sbr.rel (0) target = $region21
    $region20: #{tpu_custom_call.1} parent=1 // pred_region
      %40 = dma.done [#allocation3], 256
    $region21: #{tpu_custom_call.1} parent=1 // pred_fallthru
      _
    // Predicated region
    $region22: #{tpu_custom_call.1} parent=1 // pred_check
      _
    $region23: #{tpu_custom_call.1} parent=1 // pred_check_branch
      %42 = sbr.rel (0) target = $region25
    $region24: #{tpu_custom_call.1} parent=1 // pred_region
      %43 = dma.done [#allocation6], 8192
    $region25: #{tpu_custom_call.1} parent=1 // pred_fallthru
      _
    %v44 = vld [vmem:[%s3] sm:$0xf]
    %v45 = vld [vmem:[%s3 + $0x4] sm:$0x1]
    %v46 = vld [vmem:[%s0] sm:$0xff]
    %v47 = vld [vmem:[#allocation2] sm:$0xff]
    %v48 = vld [vmem:[#allocation2 + $0x8] sm:$0xff]
    %v50 = vlaneseq
    %v51 = vshrl.u32 %v50, 7
    %v52 = vsub.s32 0, %v51
    %v53 = vrot.slane %v44, %v52
    %v54 = vlaneseq
    %v55 = vshrl.u32 %v54, 7
    %v56 = vsub.s32 1, %v55
    %v57 = vrot.slane %v44, %v56
    %v58 = vlaneseq
    %v59 = vshrl.u32 %v58, 7
    %v60 = vsub.s32 2, %v59
    %v61 = vrot.slane %v44, %v60
    %v62 = vlaneseq
    %v63 = vshrl.u32 %v62, 7
    %v64 = vsub.s32 3, %v63
    %v65 = vrot.slane %v44, %v64
    %v72 = vcombine.high %v47, %v47
    %v73 = vcombine.high %v48, %v48
    %vm74 = vcmask 31744
    %v76 = vsel %vm74, %v46, 0
    %vm78 = vcmask 1043456
    %v79 = vsel %vm78, %v47, 0
    %v81 = vsel %vm78, %v72, 0
    %v83 = vsel %vm78, %v48, 0
    %v85 = vsel %vm78, %v73, 0
    %87 = vmatprep.subr.mxu0 %v81
    %88 = vmatpush1.msra.mxu0 %v79
    %89 = vmatprep.subr.mxu0 0.0
    %90 = vmatpush1.msra.mxu0 0.0
    %91 = vmatprep.subr.mxu0 0.0
    %92 = vmatpush1.msra.mxu0 0.0
    %93 = vmatprep.subr.mxu0 0.0
    %94 = vmatpush1.msra.mxu0 0.0
    %95 = vmatprep.subr.mxu0 0.0
    %96 = vmatpush1.msra.mxu0 0.0
    %97 = vmatprep.subr.mxu0 0.0
    %98 = vmatpush1.msra.mxu0 0.0
    %99 = vmatprep.subr.mxu0 0.0
    %100 = vmatpush1.msra.mxu0 0.0
    %101 = vmatprep.subr.mxu0 0.0
    %102 = vmatpush1.msra.mxu0 0.0
    %103 = vmatprep.subr.mxu0 0.0
    %104 = vmatpush1.msra.mxu0 0.0
    %105 = vmatprep.subr.mxu0 0.0
    %106 = vmatpush1.msra.mxu0 0.0
    %107 = vmatprep.subr.mxu0 0.0
    %108 = vmatpush1.msra.mxu0 0.0
    %109 = vmatprep.subr.mxu0 0.0
    %110 = vmatpush1.msra.mxu0 0.0
    %111 = vmatprep.subr.mxu0 0.0
    %112 = vmatpush1.msra.mxu0 0.0
    %113 = vmatprep.subr.mxu0 0.0
    %114 = vmatpush1.msra.mxu0 0.0
    %115 = vmatprep.subr.mxu0 0.0
    %116 = vmatpush1.msra.mxu0 0.0
    %117 = vmatprep.subr.mxu0 0.0
    %118 = vmatpush1.msra.mxu0 0.0
    %119 = vmatprep.subr.mxu0 0.0
    %120 = vmatpush1.msra.mxu0 0.0
    %121 = vmatprep.subr.mxu0 0.0
    %122 = vmatpush1.msra.mxu0 0.0
    %123 = vmatprep.subr.mxu0 0.0
    %124 = vmatpush1.msra.mxu0 0.0
    %125 = vmatprep.subr.mxu0 0.0
    %126 = vmatpush1.msra.mxu0 0.0
    %127 = vmatprep.subr.mxu0 0.0
    %128 = vmatpush1.msra.mxu0 0.0
    %129 = vmatprep.subr.mxu0 0.0
    %130 = vmatpush1.msra.mxu0 0.0
    %131 = vmatprep.subr.mxu0 0.0
    %132 = vmatpush1.msra.mxu0 0.0
    %133 = vmatprep.subr.mxu0 0.0
    %134 = vmatpush1.msra.mxu0 0.0
    %135 = vmatprep.subr.mxu0 0.0
    %136 = vmatpush1.msra.mxu0 0.0
    %137 = vmatprep.subr.mxu0 0.0
    %138 = vmatpush1.msra.mxu0 0.0
    %139 = vmatprep.subr.mxu0 0.0
    %140 = vmatpush1.msra.mxu0 0.0
    %141 = vmatprep.subr.mxu0 0.0
    %142 = vmatpush1.msra.mxu0 0.0
    %143 = vmatprep.subr.mxu0 0.0
    %144 = vmatpush1.msra.mxu0 0.0
    %145 = vmatprep.subr.mxu0 0.0
    %146 = vmatpush1.msra.mxu0 0.0
    %147 = vmatprep.subr.mxu0 0.0
    %148 = vmatpush1.msra.mxu0 0.0
    %149 = vmatprep.subr.mxu0 0.0
    %150 = vmatpush1.msra.mxu0 0.0
    %151 = vmatprep.mubr.f32.mxu0 0.0
    %152 = vmatmul.mubr.f32.gmra.mrb[0].mxu0 %v76
    %v153 = vpop.f32.mrb[0].mxu0
    %v154 = vadd.f32 %v53, %v153
    %v155 = vpop.f32.mrb[0].mxu0
    %v156 = vadd.f32 %v57, %v155
    %157 = vdwg.mxu0
    %158 = vmatprep.subr.mxu0 %v85
    %159 = vmatpush1.msra.mxu0 %v83
    %160 = vmatprep.subr.mxu0 0.0
    %161 = vmatpush1.msra.mxu0 0.0
    %162 = vmatprep.subr.mxu0 0.0
    %163 = vmatpush1.msra.mxu0 0.0
    %164 = vmatprep.subr.mxu0 0.0
    %165 = vmatpush1.msra.mxu0 0.0
    %166 = vmatprep.subr.mxu0 0.0
    %167 = vmatpush1.msra.mxu0 0.0
    %168 = vmatprep.subr.mxu0 0.0
    %169 = vmatpush1.msra.mxu0 0.0
    %170 = vmatprep.subr.mxu0 0.0
    %171 = vmatpush1.msra.mxu0 0.0
    %172 = vmatprep.subr.mxu0 0.0
    %173 = vmatpush1.msra.mxu0 0.0
    %174 = vmatprep.subr.mxu0 0.0
    %175 = vmatpush1.msra.mxu0 0.0
    %176 = vmatprep.subr.mxu0 0.0
    %177 = vmatpush1.msra.mxu0 0.0
    %178 = vmatprep.subr.mxu0 0.0
    %179 = vmatpush1.msra.mxu0 0.0
    %180 = vmatprep.subr.mxu0 0.0
    %181 = vmatpush1.msra.mxu0 0.0
    %182 = vmatprep.subr.mxu0 0.0
    %183 = vmatpush1.msra.mxu0 0.0
    %184 = vmatprep.subr.mxu0 0.0
    %185 = vmatpush1.msra.mxu0 0.0
    %186 = vmatprep.subr.mxu0 0.0
    %187 = vmatpush1.msra.mxu0 0.0
    %188 = vmatprep.subr.mxu0 0.0
    %189 = vmatpush1.msra.mxu0 0.0
    %190 = vmatprep.subr.mxu0 0.0
    %191 = vmatpush1.msra.mxu0 0.0
    %192 = vmatprep.subr.mxu0 0.0
    %193 = vmatpush1.msra.mxu0 0.0
    %194 = vmatprep.subr.mxu0 0.0
    %195 = vmatpush1.msra.mxu0 0.0
    %196 = vmatprep.subr.mxu0 0.0
    %197 = vmatpush1.msra.mxu0 0.0
    %198 = vmatprep.subr.mxu0 0.0
    %199 = vmatpush1.msra.mxu0 0.0
    %200 = vmatprep.subr.mxu0 0.0
    %201 = vmatpush1.msra.mxu0 0.0
    %202 = vmatprep.subr.mxu0 0.0
    %203 = vmatpush1.msra.mxu0 0.0
    %204 = vmatprep.subr.mxu0 0.0
    %205 = vmatpush1.msra.mxu0 0.0
    %206 = vmatprep.subr.mxu0 0.0
    %207 = vmatpush1.msra.mxu0 0.0
    %208 = vmatprep.subr.mxu0 0.0
    %209 = vmatpush1.msra.mxu0 0.0
    %210 = vmatprep.subr.mxu0 0.0
    %211 = vmatpush1.msra.mxu0 0.0
    %212 = vmatprep.subr.mxu0 0.0
    %213 = vmatpush1.msra.mxu0 0.0
    %214 = vmatprep.subr.mxu0 0.0
    %215 = vmatpush1.msra.mxu0 0.0
    %216 = vmatprep.subr.mxu0 0.0
    %217 = vmatpush1.msra.mxu0 0.0
    %218 = vmatprep.subr.mxu0 0.0
    %219 = vmatpush1.msra.mxu0 0.0
    %220 = vmatprep.subr.mxu0 0.0
    %221 = vmatpush1.msra.mxu0 0.0
    %222 = vmatprep.mubr.f32.mxu0 0.0
    %223 = vmatmul.mubr.f32.gmra.mrb[0].mxu0 %v76
    %v224 = vpop.f32.mrb[0].mxu0
    %v225 = vadd.f32 %v61, %v224
    %v226 = vpop.f32.mrb[0].mxu0
    %v227 = vadd.f32 %v65, %v226
    %228 = vdwg.mxu0
    %v229 = vmax.f32 %v154, 0.0
    %v230 = vmax.f32 %v156, 0.0
    %v231 = vmax.f32 %v225, 0.0
    %v232 = vmax.f32 %v227, 0.0
    %v233 = vld [vmem:[#allocation5] sm:$0xff]
    %v234 = vld [vmem:[#allocation5 + $0x8] sm:$0xff]
    %v235 = vld [vmem:[#allocation5 + $0x10] sm:$0xff]
    %v236 = vld [vmem:[#allocation5 + $0x18] sm:$0xff]
    %v237 = vld [vmem:[#allocation5 + $0x20] sm:$0xff]
    %v238 = vld [vmem:[#allocation5 + $0x28] sm:$0xff]
    %v239 = vld [vmem:[#allocation5 + $0x30] sm:$0xff]
    %v240 = vld [vmem:[#allocation5 + $0x38] sm:$0xff]
    %v241 = vld [vmem:[#allocation5 + $0x40] sm:$0xff]
    %v242 = vld [vmem:[#allocation5 + $0x48] sm:$0xff]
    %v243 = vld [vmem:[#allocation5 + $0x50] sm:$0xff]
    %v244 = vld [vmem:[#allocation5 + $0x58] sm:$0xff]
    %v245 = vld [vmem:[#allocation5 + $0x60] sm:$0xff]
    %v246 = vld [vmem:[#allocation5 + $0x68] sm:$0xff]
    %v247 = vld [vmem:[#allocation5 + $0x70] sm:$0xff]
    %v248 = vld [vmem:[#allocation5 + $0x78] sm:$0xff]
    %v249 = vld [vmem:[#allocation5 + $0x80] sm:$0xff]
    %v250 = vld [vmem:[#allocation5 + $0x88] sm:$0xff]
    %v251 = vld [vmem:[#allocation5 + $0x90] sm:$0xff]
    %v252 = vld [vmem:[#allocation5 + $0x98] sm:$0xff]
    %v253 = vld [vmem:[#allocation5 + $0xa0] sm:$0xff]
    %v254 = vld [vmem:[#allocation5 + $0xa8] sm:$0xff]
    %v255 = vld [vmem:[#allocation5 + $0xb0] sm:$0xff]
    %v256 = vld [vmem:[#allocation5 + $0xb8] sm:$0xff]
    %v257 = vld [vmem:[#allocation5 + $0xc0] sm:$0xff]
    %v258 = vld [vmem:[#allocation5 + $0xc8] sm:$0xff]
    %v259 = vld [vmem:[#allocation5 + $0xd0] sm:$0xff]
    %v260 = vld [vmem:[#allocation5 + $0xd8] sm:$0xff]
    %v261 = vld [vmem:[#allocation5 + $0xe0] sm:$0xff]
    %v262 = vld [vmem:[#allocation5 + $0xe8] sm:$0xff]
    %v263 = vld [vmem:[#allocation5 + $0xf0] sm:$0xff]
    %v264 = vld [vmem:[#allocation5 + $0xf8] sm:$0xff]
    %v265 = vld [vmem:[#allocation5 + $0x100] sm:$0xff]
    %v266 = vld [vmem:[#allocation5 + $0x108] sm:$0xff]
    %v267 = vld [vmem:[#allocation5 + $0x110] sm:$0xff]
    %v268 = vld [vmem:[#allocation5 + $0x118] sm:$0xff]
    %v269 = vld [vmem:[#allocation5 + $0x120] sm:$0xff]
    %v270 = vld [vmem:[#allocation5 + $0x128] sm:$0xff]
    %v271 = vld [vmem:[#allocation5 + $0x130] sm:$0xff]
    %v272 = vld [vmem:[#allocation5 + $0x138] sm:$0xff]
    %v273 = vld [vmem:[#allocation5 + $0x140] sm:$0xff]
    %v274 = vld [vmem:[#allocation5 + $0x148] sm:$0xff]
    %v275 = vld [vmem:[#allocation5 + $0x150] sm:$0xff]
    %v276 = vld [vmem:[#allocation5 + $0x158] sm:$0xff]
    %v277 = vld [vmem:[#allocation5 + $0x160] sm:$0xff]
    %v278 = vld [vmem:[#allocation5 + $0x168] sm:$0xff]
    %v279 = vld [vmem:[#allocation5 + $0x170] sm:$0xff]
    %v280 = vld [vmem:[#allocation5 + $0x178] sm:$0xff]
    %v281 = vld [vmem:[#allocation5 + $0x180] sm:$0xff]
    %v282 = vld [vmem:[#allocation5 + $0x188] sm:$0xff]
    %v283 = vld [vmem:[#allocation5 + $0x190] sm:$0xff]
    %v284 = vld [vmem:[#allocation5 + $0x198] sm:$0xff]
    %v285 = vld [vmem:[#allocation5 + $0x1a0] sm:$0xff]
    %v286 = vld [vmem:[#allocation5 + $0x1a8] sm:$0xff]
    %v287 = vld [vmem:[#allocation5 + $0x1b0] sm:$0xff]
    %v288 = vld [vmem:[#allocation5 + $0x1b8] sm:$0xff]
    %v289 = vld [vmem:[#allocation5 + $0x1c0] sm:$0xff]
    %v290 = vld [vmem:[#allocation5 + $0x1c8] sm:$0xff]
    %v291 = vld [vmem:[#allocation5 + $0x1d0] sm:$0xff]
    %v292 = vld [vmem:[#allocation5 + $0x1d8] sm:$0xff]
    %v293 = vld [vmem:[#allocation5 + $0x1e0] sm:$0xff]
    %v294 = vld [vmem:[#allocation5 + $0x1e8] sm:$0xff]
    %v295 = vld [vmem:[#allocation5 + $0x1f0] sm:$0xff]
    %v296 = vld [vmem:[#allocation5 + $0x1f8] sm:$0xff]
    %v298 = vlaneseq
    %v299 = vshrl.u32 %v298, 7
    %v300 = vsub.s32 0, %v299
    %v301 = vrot.slane %v45, %v300
    %303 = vmatprep.subr.mxu0 0.0
    %304 = vmatpush1.msra.mxu0 %v233
    %305 = vmatprep.subr.mxu0 0.0
    %306 = vmatpush1.msra.mxu0 %v234
    %307 = vmatprep.subr.mxu0 0.0
    %308 = vmatpush1.msra.mxu0 %v235
    %309 = vmatprep.subr.mxu0 0.0
    %310 = vmatpush1.msra.mxu0 %v236
    %311 = vmatprep.subr.mxu0 0.0
    %312 = vmatpush1.msra.mxu0 %v237
    %313 = vmatprep.subr.mxu0 0.0
    %314 = vmatpush1.msra.mxu0 %v238
    %315 = vmatprep.subr.mxu0 0.0
    %316 = vmatpush1.msra.mxu0 %v239
    %317 = vmatprep.subr.mxu0 0.0
    %318 = vmatpush1.msra.mxu0 %v240
    %319 = vmatprep.subr.mxu0 0.0
    %320 = vmatpush1.msra.mxu0 %v241
    %321 = vmatprep.subr.mxu0 0.0
    %322 = vmatpush1.msra.mxu0 %v242
    %323 = vmatprep.subr.mxu0 0.0
    %324 = vmatpush1.msra.mxu0 %v243
    %325 = vmatprep.subr.mxu0 0.0
    %326 = vmatpush1.msra.mxu0 %v244
    %327 = vmatprep.subr.mxu0 0.0
    %328 = vmatpush1.msra.mxu0 %v245
    %329 = vmatprep.subr.mxu0 0.0
    %330 = vmatpush1.msra.mxu0 %v246
    %331 = vmatprep.subr.mxu0 0.0
    %332 = vmatpush1.msra.mxu0 %v247
    %333 = vmatprep.subr.mxu0 0.0
    %334 = vmatpush1.msra.mxu0 %v248
    %335 = vmatprep.subr.mxu0 0.0
    %336 = vmatpush1.msra.mxu0 %v249
    %337 = vmatprep.subr.mxu0 0.0
    %338 = vmatpush1.msra.mxu0 %v250
    %339 = vmatprep.subr.mxu0 0.0
    %340 = vmatpush1.msra.mxu0 %v251
    %341 = vmatprep.subr.mxu0 0.0
    %342 = vmatpush1.msra.mxu0 %v252
    %343 = vmatprep.subr.mxu0 0.0
    %344 = vmatpush1.msra.mxu0 %v253
    %345 = vmatprep.subr.mxu0 0.0
    %346 = vmatpush1.msra.mxu0 %v254
    %347 = vmatprep.subr.mxu0 0.0
    %348 = vmatpush1.msra.mxu0 %v255
    %349 = vmatprep.subr.mxu0 0.0
    %350 = vmatpush1.msra.mxu0 %v256
    %351 = vmatprep.subr.mxu0 0.0
    %352 = vmatpush1.msra.mxu0 %v257
    %353 = vmatprep.subr.mxu0 0.0
    %354 = vmatpush1.msra.mxu0 %v258
    %355 = vmatprep.subr.mxu0 0.0
    %356 = vmatpush1.msra.mxu0 %v259
    %357 = vmatprep.subr.mxu0 0.0
    %358 = vmatpush1.msra.mxu0 %v260
    %359 = vmatprep.subr.mxu0 0.0
    %360 = vmatpush1.msra.mxu0 %v261
    %361 = vmatprep.subr.mxu0 0.0
    %362 = vmatpush1.msra.mxu0 %v262
    %363 = vmatprep.subr.mxu0 0.0
    %364 = vmatpush1.msra.mxu0 %v263
    %365 = vmatprep.subr.mxu0 0.0
    %366 = vmatpush1.msra.mxu0 %v264
    %367 = vmatprep.mubr.f32.mxu0 %v230
    %368 = vmatmul.mubr.f32.gmra.mrb[0].mxu0 %v229
    %v369 = vpop.f32.mrb[0].mxu0
    %v370 = vadd.f32 %v301, %v369
    %v371 = vpop.f32.mrb[0].mxu0
    %372 = vdwg.mxu0
    %373 = vmatprep.subr.mxu0 0.0
    %374 = vmatpush1.msra.mxu0 %v265
    %375 = vmatprep.subr.mxu0 0.0
    %376 = vmatpush1.msra.mxu0 %v266
    %377 = vmatprep.subr.mxu0 0.0
    %378 = vmatpush1.msra.mxu0 %v267
    %379 = vmatprep.subr.mxu0 0.0
    %380 = vmatpush1.msra.mxu0 %v268
    %381 = vmatprep.subr.mxu0 0.0
    %382 = vmatpush1.msra.mxu0 %v269
    %383 = vmatprep.subr.mxu0 0.0
    %384 = vmatpush1.msra.mxu0 %v270
    %385 = vmatprep.subr.mxu0 0.0
    %386 = vmatpush1.msra.mxu0 %v271
    %387 = vmatprep.subr.mxu0 0.0
    %388 = vmatpush1.msra.mxu0 %v272
    %389 = vmatprep.subr.mxu0 0.0
    %390 = vmatpush1.msra.mxu0 %v273
    %391 = vmatprep.subr.mxu0 0.0
    %392 = vmatpush1.msra.mxu0 %v274
    %393 = vmatprep.subr.mxu0 0.0
    %394 = vmatpush1.msra.mxu0 %v275
    %395 = vmatprep.subr.mxu0 0.0
    %396 = vmatpush1.msra.mxu0 %v276
    %397 = vmatprep.subr.mxu0 0.0
    %398 = vmatpush1.msra.mxu0 %v277
    %399 = vmatprep.subr.mxu0 0.0
    %400 = vmatpush1.msra.mxu0 %v278
    %401 = vmatprep.subr.mxu0 0.0
    %402 = vmatpush1.msra.mxu0 %v279
    %403 = vmatprep.subr.mxu0 0.0
    %404 = vmatpush1.msra.mxu0 %v280
    %405 = vmatprep.subr.mxu0 0.0
    %406 = vmatpush1.msra.mxu0 %v281
    %407 = vmatprep.subr.mxu0 0.0
    %408 = vmatpush1.msra.mxu0 %v282
    %409 = vmatprep.subr.mxu0 0.0
    %410 = vmatpush1.msra.mxu0 %v283
    %411 = vmatprep.subr.mxu0 0.0
    %412 = vmatpush1.msra.mxu0 %v284
    %413 = vmatprep.subr.mxu0 0.0
    %414 = vmatpush1.msra.mxu0 %v285
    %415 = vmatprep.subr.mxu0 0.0
    %416 = vmatpush1.msra.mxu0 %v286
    %417 = vmatprep.subr.mxu0 0.0
    %418 = vmatpush1.msra.mxu0 %v287
    %419 = vmatprep.subr.mxu0 0.0
    %420 = vmatpush1.msra.mxu0 %v288
    %421 = vmatprep.subr.mxu0 0.0
    %422 = vmatpush1.msra.mxu0 %v289
    %423 = vmatprep.subr.mxu0 0.0
    %424 = vmatpush1.msra.mxu0 %v290
    %425 = vmatprep.subr.mxu0 0.0
    %426 = vmatpush1.msra.mxu0 %v291
    %427 = vmatprep.subr.mxu0 0.0
    %428 = vmatpush1.msra.mxu0 %v292
    %429 = vmatprep.subr.mxu0 0.0
    %430 = vmatpush1.msra.mxu0 %v293
    %431 = vmatprep.subr.mxu0 0.0
    %432 = vmatpush1.msra.mxu0 %v294
    %433 = vmatprep.subr.mxu0 0.0
    %434 = vmatpush1.msra.mxu0 %v295
    %435 = vmatprep.subr.mxu0 0.0
    %436 = vmatpush1.msra.mxu0 %v296
    %437 = vmatprep.mubr.f32.mxu0 %v232
    %438 = vmatmul.mubr.f32.gmra.mrb[0].mxu0 %v231
    %v439 = vpop.f32.mrb[0].mxu0
    %v440 = vadd.f32 %v370, %v439
    %v441 = vpop.f32.mrb[0].mxu0
    %442 = vdwg.mxu0
    %443 = vst [vmem:[#allocation7] sm:$0xff] %v440
    // Predicated region
    $region26: #{tpu_custom_call.1} parent=1 // pred_check
      _
    $region27: #{tpu_custom_call.1} parent=1 // pred_check_branch
      %445 = sbr.rel (0) target = $region29
    $region28: #{tpu_custom_call.1} parent=1 // pred_region
      %s447 = ssub.s32 128, 128
      %448 = vsyncadd [#allocation4], %s447
      %s450 = sshll.u32 [#allocation7], 4
      %s451 = int_to_ptr.vmem [resolvable:$true] %s450
      %453 = dma.vmem_to_hbm [thread:$0]  %s451, 128, %s4, [#allocation4]
    $region29: #{tpu_custom_call.1} parent=1 // pred_fallthru
      _
    // Predicated region
    $region30: #{tpu_custom_call.1} parent=1 // pred_check
      _
    $region31: #{tpu_custom_call.1} parent=1 // pred_check_branch
      %455 = sbr.rel (0) target = $region33
    $region32: #{tpu_custom_call.1} parent=1 // pred_region
      %456 = dma.done [#allocation4], 128
    $region33: #{tpu_custom_call.1} parent=1 // pred_fallthru
      _
    %457 = vsyncpa [#allocation3], 1
    %458 = vsyncpa [#allocation6], 1
    %459 = vsyncpa [#allocation4], 1

</llo_original>
